<compile_context>
chip_gen: v6e
topology: v6e:2x2x1
jax: 0.10.0
libtpu: 0.0.40
codegen_flags: <defaults>
</compile_context>

<pallas_src>
import functools

import jax
import jax.numpy as jnp
from jax.experimental import pallas as pl
from jax.experimental.pallas import tpu as pltpu


def _moving_avg_kernel(x_ref, o_ref, xp_ref, *, kernel_size, pad, off, group,
                       n_groups, time_chunk):
    # x_ref : (L, TN)            input lane-tile (time on sublanes, lanes dense)
    # o_ref : (L_dense, TN)      dense (stride=1) moving average for this lane-tile
    # xp_ref: (off+L+2*pad, TN)  f32 scratch holding the replicate-padded tile; the
    #                            padded sequence starts at row `off` so that the bulk
    #                            copy below lands sublane-aligned.
    K = kernel_size
    L = x_ref.shape[0]
    TN = x_ref.shape[1]
    l_dense = o_ref.shape[0]
    g, q = group, n_groups
    inv_k = jnp.float32(1.0 / K)

    # ---- replicate padding, built in VMEM (no HBM padding copy) ----
    xp_ref[pl.ds(off + pad, L), :] = x_ref[...].astype(jnp.float32)
    if pad > 0:
        first = x_ref[0:1, :].astype(jnp.float32)
        last = x_ref[L - 1:L, :].astype(jnp.float32)
        xp_ref[pl.ds(off, pad), :] = jnp.broadcast_to(first, (pad, TN))
        xp_ref[pl.ds(off + pad + L, pad), :] = jnp.broadcast_to(last, (pad, TN))

    def window_sums(base, rows):
        # Dense window means for output rows [base, base+rows).
        # Two-level decomposition: P[s] = sum_{k<g} xp[s+k];
        #   out[t] = sum_{a<q} P[t + a*g] + sum_{j=g*q}^{K-1} xp[t+j]
        p_rows = rows + g * (q - 1)
        p = xp_ref[pl.ds(off + base, p_rows), :]
        for k in range(1, g):                       # build partial sums once
            p = p + xp_ref[pl.ds(off + base + k, p_rows), :]
        acc = p[0:rows, :]
        for a in range(1, q):                       # reuse them q times
            acc = acc + p[a * g:a * g + rows, :]
        for j in range(g * q, K):                   # leftover (< g) terms
            acc = acc + xp_ref[pl.ds(off + base + j, rows), :]
        return (acc * inv_k).astype(o_ref.dtype)

    n_full = l_dense // time_chunk
    rem = l_dense - n_full * time_chunk

    if n_full > 0:
        def body(ci, carry):
            base = pl.multiple_of(ci * time_chunk, time_chunk)
            o_ref[pl.ds(base, time_chunk), :] = window_sums(base, time_chunk)
            return carry
        jax.lax.fori_loop(0, n_full, body, 0)
    if rem > 0:
        base = n_full * time_chunk
        o_ref[pl.ds(base, rem), :] = window_sums(base, rem)


def moving_avg(x, kernel_size, stride=1):
    """x: (B, L, C) -> (B, L_out, C), matching the PyTorch moving_avg module."""
    B, L, C = x.shape
    K = int(kernel_size)
    stride = int(stride)
    assert K >= 1 and stride >= 1
    pad = (K - 1) // 2
    L_pad = L + 2 * pad
    assert K <= L_pad, "kernel_size too large for sequence length"
    L_dense = L_pad - K + 1                 # stride-1 (dense) output length
    L_out = (L_pad - K) // stride + 1       # final output length

    N = B * C
    # ---- lane-dense layout: (B, L, C) -> (L, B*C) (layout plumbing in the wrapper) ----
    xt = jnp.transpose(x, (1, 0, 2)).reshape(L, N)

    # lane-tile size (multiple of 128) + VMEM budget check (fits v5e/v6e/v7x defaults)
    if N % 256 == 0:
        TN = 256
    elif N % 128 == 0 or N <= 128:
        TN = 128
    else:
        TN = 256

    def _vmem_bytes(tn):
        # double-buffered in/out blocks + padded f32 scratch
        return 4 * tn * (2 * L + (L_pad + 8) + 2 * L_dense)

    if TN == 256 and _vmem_bytes(256) > 12 * 1024 * 1024:
        TN = 128
    # TODO(synk): for extremely long sequences (L ~ 10k+) the full time axis may not fit
    # VMEM even at TN=128; that would need an additional halo-tiled time grid axis.

    N_pad = ((N + TN - 1) // TN) * TN
    if N_pad != N:
        xt = jnp.pad(xt, ((0, 0), (0, N_pad - N)))

    # two-level window-sum decomposition (minimise VMEM loads per output row)
    best_g, best_cost = 1, None
    for g_try in range(1, K + 1):
        q_try, r_try = divmod(K, g_try)
        cost = g_try + q_try + r_try
        if best_cost is None or cost < best_cost:
            best_g, best_cost = g_try, cost
    g = best_g
    q = K // g

    off = (-pad) % 8          # makes the bulk scratch copy sublane-aligned
    time_chunk = 64

    kernel = functools.partial(
        _moving_avg_kernel, kernel_size=K, pad=pad, off=off, group=g, n_groups=q,
        time_chunk=time_chunk)

    out_dense = pl.pallas_call(
        kernel,
        out_shape=jax.ShapeDtypeStruct((L_dense, N_pad), x.dtype),
        grid=(N_pad // TN,),
        in_specs=[pl.BlockSpec((L, TN), lambda j: (0, j))],
        out_specs=pl.BlockSpec((L_dense, TN), lambda j: (0, j)),
        scratch_shapes=[pltpu.VMEM((off + L_pad, TN), jnp.float32)],
        compiler_params=pltpu.CompilerParams(dimension_semantics=("parallel",)),
    )(xt)

    out = out_dense[:, :N]
    if stride != 1:
        out = out[::stride, :]
    return out.reshape(L_out, B, C).transpose(1, 0, 2)


def _reference_moving_avg(x, kernel_size, stride=1):
    # Pure-JAX reference mirroring the PyTorch forward exactly.
    pad = (kernel_size - 1) // 2
    front = jnp.repeat(x[:, 0:1, :], pad, axis=1)
    end = jnp.repeat(x[:, -1:, :], pad, axis=1)
    xp = jnp.concatenate([front, x, end], axis=1)  # (B, L_pad, C)
    L_pad = xp.shape[1]
    L_out = (L_pad - kernel_size) // stride + 1
    windows = [
        xp[:, t * stride:t * stride + kernel_size, :].mean(axis=1, keepdims=True)
        for t in range(L_out)
    ]
    return jnp.concatenate(windows, axis=1)


if __name__ == "__main__":
    key = jax.random.PRNGKey(0)
    cases = [
        # (B, L, C, kernel_size, stride)
        (2, 16, 8, 5, 1),     # small case (single tail chunk, small window)
        (2, 96, 8, 25, 1),    # TEMPO default kernel_size=25; exercises chunk loop + sqrt decomposition
        (2, 16, 8, 4, 2),     # even kernel + stride>1 (dense kernel + wrapper subsample)
    ]
    for i, (B, L, C, K, s) in enumerate(cases):
        key, sub = jax.random.split(key)
        x = jax.random.normal(sub, (B, L, C), dtype=jnp.float32)
        out = jax.block_until_ready(moving_avg(x, K, s))
        ref = _reference_moving_avg(x, K, s)
        assert out.shape == ref.shape, (i, out.shape, ref.shape)
        assert jnp.allclose(out, ref, atol=1e-5, rtol=1e-5), f"mismatch vs reference in case {i}"
    print("KERNEL_OK")
</pallas_src>

<mosaic_0001>
module attributes {stable_mosaic.version = 11 : i64} {
  func.func @_moving_avg_kernel(%arg0: i32, %arg1: memref<16x128xf32, #tpu.memory_space<vmem>>, %arg2: memref<16x128xf32, #tpu.memory_space<vmem>>, %arg3: memref<26x128xf32, #tpu.memory_space<vmem>>) attributes {dimension_semantics = [#tpu.dimension_semantics<parallel>], iteration_bounds = array<i64: 1>, scalar_prefetch = 0 : i64, scratch_operands = 1 : i64, tpu.core_type = #tpu.core_type<tc>, window_params = [{transform_indices = @transform_0, window_bounds = array<i64: 16, 128>}, {transform_indices = @transform_1, window_bounds = array<i64: 16, 128>}]} {
    %c0 = arith.constant 0 : index
    %c0_0 = arith.constant 0 : index
    %0 = vector.load %arg1[%c0, %c0_0] : memref<16x128xf32, #tpu.memory_space<vmem>>, vector<16x128xf32>
    %c8 = arith.constant 8 : index
    %c0_1 = arith.constant 0 : index
    %1 = vector.load %arg3[%c8, %c0_1] : memref<26x128xf32, #tpu.memory_space<vmem>>, vector<16x128xf32>
    tpu.vector_store %arg3[%c8, %c0_1], %0 {strides = array<i32>} : memref<26x128xf32, #tpu.memory_space<vmem>>, vector<16x128xf32>,
    %c0_2 = arith.constant 0 : index
    %c0_3 = arith.constant 0 : index
    %2 = vector.load %arg1[%c0_2, %c0_3] : memref<16x128xf32, #tpu.memory_space<vmem>>, vector<1x128xf32>
    %c15 = arith.constant 15 : index
    %c0_4 = arith.constant 0 : index
    %3 = vector.load %arg1[%c15, %c0_4] : memref<16x128xf32, #tpu.memory_space<vmem>>, vector<1x128xf32>
    %4 = vector.shape_cast %2 : vector<1x128xf32> to vector<1x128xf32>
    %5 = vector.broadcast %4 : vector<1x128xf32> to vector<2x128xf32>
    %c6 = arith.constant 6 : index
    %c0_5 = arith.constant 0 : index
    %6 = vector.load %arg3[%c6, %c0_5] : memref<26x128xf32, #tpu.memory_space<vmem>>, vector<2x128xf32>
    tpu.vector_store %arg3[%c6, %c0_5], %5 {strides = array<i32>} : memref<26x128xf32, #tpu.memory_space<vmem>>, vector<2x128xf32>,
    %7 = vector.shape_cast %3 : vector<1x128xf32> to vector<1x128xf32>
    %8 = vector.broadcast %7 : vector<1x128xf32> to vector<2x128xf32>
    %c24 = arith.constant 24 : index
    %c0_6 = arith.constant 0 : index
    %9 = vector.load %arg3[%c24, %c0_6] : memref<26x128xf32, #tpu.memory_space<vmem>>, vector<2x128xf32>
    tpu.vector_store %arg3[%c24, %c0_6], %8 {strides = array<i32>} : memref<26x128xf32, #tpu.memory_space<vmem>>, vector<2x128xf32>,
    %c6_7 = arith.constant 6 : index
    %c0_8 = arith.constant 0 : index
    %10 = vector.load %arg3[%c6_7, %c0_8] : memref<26x128xf32, #tpu.memory_space<vmem>>, vector<18x128xf32>
    %c7 = arith.constant 7 : index
    %c0_9 = arith.constant 0 : index
    %11 = vector.load %arg3[%c7, %c0_9] : memref<26x128xf32, #tpu.memory_space<vmem>>, vector<18x128xf32>
    %12 = arith.addf %10, %11 : vector<18x128xf32>
    %13 = vector.extract_strided_slice %12 {offsets = [0, 0], sizes = [16, 128], strides = [1, 1]} : vector<18x128xf32> to vector<16x128xf32>
    %14 = vector.extract_strided_slice %12 {offsets = [2, 0], sizes = [16, 128], strides = [1, 1]} : vector<18x128xf32> to vector<16x128xf32>
    %15 = arith.addf %13, %14 : vector<16x128xf32>
    %c10 = arith.constant 10 : index
    %c0_10 = arith.constant 0 : index
    %16 = vector.load %arg3[%c10, %c0_10] : memref<26x128xf32, #tpu.memory_space<vmem>>, vector<16x128xf32>
    %17 = arith.addf %15, %16 : vector<16x128xf32>
    %cst = arith.constant 2.000000e-01 : f32
    %18 = vector.broadcast %cst : f32 to vector<16x128xf32>
    %19 = arith.mulf %17, %18 : vector<16x128xf32>
    %c0_11 = arith.constant 0 : index
    %c0_12 = arith.constant 0 : index
    %20 = vector.load %arg2[%c0_11, %c0_12] : memref<16x128xf32, #tpu.memory_space<vmem>>, vector<16x128xf32>
    tpu.vector_store %arg2[%c0_11, %c0_12], %19 {strides = array<i32>} : memref<16x128xf32, #tpu.memory_space<vmem>>, vector<16x128xf32>,
    return
  }
  func.func @transform_0(%arg0: i32) -> (i32, i32) {
    %c0_i32 = arith.constant 0 : i32
    %c0_i32_0 = arith.constant 0 : i32
    return %c0_i32, %arg0 : i32, i32
  }
  func.func @transform_1(%arg0: i32) -> (i32, i32) {
    %c0_i32 = arith.constant 0 : i32
    %c0_i32_0 = arith.constant 0 : i32
    return %c0_i32, %arg0 : i32, i32
  }
}

</mosaic_0001>

<llo_original>
// kernel: tpu_custom_call.1
$region0: #{tpu_custom_call.1}
  #allocation0 [shape = 'u32[]', space=smem, size = 0x4, offset = 0x4, fixed_abs, tag = 'smem constant byte address 0x4 - core index']
  #allocation1 [shape = 'u32[144,128]{1,0:T(1,128)}', space=vmem, size = 0x12000, scoped, tag = 'internal scratch']
  #allocation2 [shape = 'f32[26,128]{1,0:T(8,128)}', space=vmem, size = 0x4000, scoped, tag = 'scratch operand']
  %s0 = inlined_call_operand.hbm [shape: f32[16,128], index: 0, kind: input, shape index: {}]
  %s1 = inlined_call_operand.hbm [shape: f32[16,128], index: 1, kind: output, shape index: {}]
  %s2 = sld [smem:[#allocation0]]
  $region18: #{tpu_custom_call.1} parent=0
    _
  %s4 = ssub.s32 1, %s2
  %s5 = scalar_select 0, %s4, %s2
  $region1: #{tpu_custom_call.1} parent=0
    #allocation3 [shape = 'u8[8192]{0}', space=vmem, size = 0x2000, scoped, tag = 'input window, operand 0, single buffered']
    #allocation4 [shape = 's32[1]{0}', space=sflag, size = 0x4, scoped, tag = 'scoped memory for tpu_custom_call.1']
    #allocation5 [shape = 's32[1]{0}', space=sflag, size = 0x4, scoped, tag = 'scoped memory for tpu_custom_call.1']
    #allocation6 [shape = 'u8[8192]{0}', space=vmem, size = 0x2000, scoped, tag = 'output window, operand 0, single buffered']
    %6 = vsyncpa [#allocation4], 0
    %7 = vsyncpa [#allocation5], 0
    // Predicated region
    $region2: #{tpu_custom_call.1} parent=1 // pred_check
      _
    $region3: #{tpu_custom_call.1} parent=1 // pred_check_branch
      %9 = sbr.rel (0) target = $region5
    $region4: #{tpu_custom_call.1} parent=1 // pred_region
      %s11 = ssub.s32 256, 256
      %12 = vsyncadd [#allocation4], %s11
      %s13 = sshll.u32 [#allocation3], 4
      %s14 = int_to_ptr.vmem [resolvable:$true] %s13
      %19 = dma.hbm_to_vmem [thread:$0]  %s0, 256, %s14, [#allocation4], 128, 128, 8
    $region5: #{tpu_custom_call.1} parent=1 // pred_fallthru
      _
    // Predicated region
    $region6: #{tpu_custom_call.1} parent=1 // pred_check
      _
    $region7: #{tpu_custom_call.1} parent=1 // pred_check_branch
      %21 = sbr.rel (0) target = $region9
    $region8: #{tpu_custom_call.1} parent=1 // pred_region
      %22 = dma.done [#allocation4], 256
    $region9: #{tpu_custom_call.1} parent=1 // pred_fallthru
      _
    %v23 = vld [vmem:[#allocation3] sm:$0xff]
    %v24 = vld [vmem:[#allocation3 + $0x8] sm:$0xff]
    %25 = vst [vmem:[#allocation2 + $0x8] sm:$0xff] %v23
    %26 = vst [vmem:[#allocation2 + $0x10] sm:$0xff] %v24
    %v27 = vld [vmem:[#allocation3] sm:$0x1]
    %v28 = vld [vmem:[#allocation3 + $0xf] sm:$0x1]
    %v29 = vlaneseq
    %v30 = vshrl.u32 %v29, 7
    %v31 = vsub.s32 0, %v30
    %v32 = vrot.slane %v27, %v31
    %33 = vst [vmem:[#allocation2 + $0x6] sm:$0x3] %v32
    %v34 = vlaneseq
    %v35 = vshrl.u32 %v34, 7
    %v36 = vsub.s32 0, %v35
    %v37 = vrot.slane %v28, %v36
    %38 = vst [vmem:[#allocation2 + $0x18] sm:$0x3] %v37
    %v39 = vld [vmem:[#allocation2 + $0x6] sm:$0xff]
    %v40 = vld [vmem:[#allocation2 + $0xe] sm:$0xff]
    %v41 = vld [vmem:[#allocation2 + $0x16] sm:$0x3]
    %v42 = vld [vmem:[#allocation2 + $0x7] sm:$0xff]
    %v43 = vld [vmem:[#allocation2 + $0xf] sm:$0xff]
    %v44 = vld [vmem:[#allocation2 + $0x17] sm:$0x3]
    %v45 = vadd.f32 %v39, %v42
    %v46 = vadd.f32 %v40, %v43
    %v47 = vadd.f32 %v41, %v44
    %vm51 = vcmask 1045504
    %v52 = vrot.slane %v45, 2
    %v53 = vrot.slane %v46, 2
    %v54 = vsel %vm51, %v52, %v53
    %v55 = vrot.slane %v47, 2
    %v56 = vsel %vm51, %v53, %v55
    %v59 = vadd.f32 %v45, %v54
    %v60 = vadd.f32 %v46, %v56
    %v61 = vld [vmem:[#allocation2 + $0xa] sm:$0xff]
    %v62 = vld [vmem:[#allocation2 + $0x12] sm:$0xff]
    %v63 = vadd.f32 %v59, %v61
    %v64 = vadd.f32 %v60, %v62
    %v65 = vmul.f32 %v63, 0.2
    %v66 = vmul.f32 %v64, 0.2
    %67 = vst [vmem:[#allocation6] sm:$0xff] %v65
    %68 = vst [vmem:[#allocation6 + $0x8] sm:$0xff] %v66
    // Predicated region
    $region10: #{tpu_custom_call.1} parent=1 // pred_check
      _
    $region11: #{tpu_custom_call.1} parent=1 // pred_check_branch
      %70 = sbr.rel (0) target = $region13
    $region12: #{tpu_custom_call.1} parent=1 // pred_region
      %s72 = ssub.s32 256, 256
      %73 = vsyncadd [#allocation5], %s72
      %s74 = sshll.u32 [#allocation6], 4
      %s75 = int_to_ptr.vmem [resolvable:$true] %s74
      %80 = dma.vmem_to_hbm [thread:$0]  %s75, 256, %s1, [#allocation5], 128, 128, 8
    $region13: #{tpu_custom_call.1} parent=1 // pred_fallthru
      _
    // Predicated region
    $region14: #{tpu_custom_call.1} parent=1 // pred_check
      _
    $region15: #{tpu_custom_call.1} parent=1 // pred_check_branch
      %82 = sbr.rel (0) target = $region17
    $region16: #{tpu_custom_call.1} parent=1 // pred_region
      %83 = dma.done [#allocation5], 256
    $region17: #{tpu_custom_call.1} parent=1 // pred_fallthru
      _
    %84 = vsyncpa [#allocation4], 1
    %85 = vsyncpa [#allocation5], 1

</llo_original>
